<compile_context>
chip_gen: v6e
topology: v6e:2x2x1
jax: 0.10.0
libtpu: 0.0.40
codegen_flags: <defaults>
</compile_context>

<pallas_src>
import sys
import functools

import jax
import jax.numpy as jnp
from jax.experimental import pallas as pl
from jax.experimental.pallas import tpu as pltpu

EPS = sys.float_info.epsilon  # 2.220446049250313e-16


def _attention_loss_kernel(*refs, num_head, n_rows, tile_rows, tiles_per_split,
                           needs_mask):
    # refs = (x_ref_0, ..., x_ref_{num_head-1}, o_ref, acc_ref)
    #   x_ref_i : (tile_rows, 128) input tile for head i (native dtype)
    #   o_ref   : (1, 8, 128) f32 output block -> per-split partial sums
    #   acc_ref : (8, 128) f32 VMEM scratch, persists across the inner axis
    x_refs = refs[:num_head]
    o_ref = refs[num_head]
    acc_ref = refs[num_head + 1]

    s = pl.program_id(0)   # split (TensorCore) index      -- "parallel"
    r = pl.program_id(1)   # tile index within the split   -- "arbitrary"

    @pl.when(r == 0)
    def _():
        acc_ref[...] = jnp.zeros_like(acc_ref)

    def accumulate(mask_rows):
        xs = [x_ref[...].astype(jnp.float32) for x_ref in x_refs]
        if mask_rows:
            # Mask MUST stay on xs (not on contrib) so garbage rows of a
            # partial block never reach the arithmetic.
            row_ids = jax.lax.broadcasted_iota(jnp.int32, (tile_rows, 128), 0)
            blk = s * tiles_per_split + r
            valid = (blk * tile_rows + row_ids) < n_rows
            xs = [jnp.where(valid, x, jnp.float32(0.0)) for x in xs]

        if num_head >= 4:
            # Mean-centered O(n) form (well-conditioned):
            #   sum_{i<j}(xi-xj)^2 = n * sum_i (xi - mean)^2   elementwise.
            ssum = xs[0]
            for x in xs[1:]:
                ssum = ssum + x
            mean = ssum * jnp.float32(1.0 / num_head)
            contrib = None
            for x in xs:
                d = x - mean
                contrib = d * d if contrib is None else contrib + d * d
            contrib = contrib * jnp.float32(num_head)
        else:
            # Few heads: direct pairwise accumulation is cheaper for n <= 3.
            contrib = None
            for i in range(num_head - 1):
                for j in range(i + 1, num_head):
                    d = xs[i] - xs[j]
                    contrib = d * d if contrib is None else contrib + d * d

        # Sublane-fold to a single (8,128) vreg accumulator: free reshape
        # (keeps the native (8,128) tiling) + pure VALU adds; no full-tile
        # VMEM store stream.
        acc_ref[...] += jnp.sum(contrib.reshape(tile_rows // 8, 8, 128), axis=0)

    if needs_mask:
        # Only boundary tiles pay for the mask; full tiles take the lean path.
        blk_end = (s * tiles_per_split + r + 1) * tile_rows

        @pl.when(blk_end <= n_rows)
        def _():
            accumulate(False)

        @pl.when(blk_end > n_rows)
        def _():
            accumulate(True)
    else:
        accumulate(False)

    @pl.when(r == pl.num_programs(1) - 1)
    def _():
        o_ref[0] = acc_ref[...]


def _pairwise_sq_sum(arrs):
    """Plain-JAX sum over all pairs of sum of squared differences (f32)."""
    total = jnp.float32(0.0)
    n = len(arrs)
    for i in range(n - 1):
        for j in range(i + 1, n):
            d = arrs[i].astype(jnp.float32) - arrs[j].astype(jnp.float32)
            total = total + jnp.sum(d * d)
    return total


def attention_loss(heads, *, max_tile_rows=8192,
                   vmem_input_budget_bytes=26 * 1024 * 1024,
                   num_splits=2):
    """heads: list of same-shaped arrays (attention maps, one per head)."""
    num_head = len(heads)
    if num_head <= 1:
        return jnp.float32(0.0)
    cnt = num_head * (num_head - 1) // 2
    n_elem = int(heads[0].size)

    rem = n_elem % 128
    n_full = n_elem - rem
    n_rows = n_full // 128

    flats = [jnp.reshape(h, (-1,)) for h in heads]

    # <128-element tail handled in plain JAX (tiny), avoiding a full jnp.pad
    # HBM copy of every head.
    tail_sq = jnp.float32(0.0)
    if rem:
        tail_sq = _pairwise_sq_sum([f[n_full:] for f in flats])

    if n_rows < 8:
        # Tiny arrays: not worth a kernel launch.
        body_sq = _pairwise_sq_sum([f[:n_full] for f in flats]) if n_rows else jnp.float32(0.0)
        total_sq = body_sq + tail_sq
    else:
        # Lane-dense (n_rows, 128) view; free reshape when rem == 0.
        # TODO(synk): when rem > 0 the prefix slice costs one extra HBM pass per
        # head; a memory_space=pl.ANY + manual-DMA variant could stream the
        # unpadded array directly.
        slabs = [(f if rem == 0 else f[:n_full]).reshape(n_rows, 128) for f in flats]

        itemsize = jnp.dtype(slabs[0].dtype).itemsize

        # Row-range split across TensorCores (megacore / v7x); harmless
        # sequential split on single-core parts.
        splits = num_splits if n_rows >= 16 else 1
        rows_per_split_target = -(-n_rows // splits)
        rows_per_split_target = -(-rows_per_split_target // 8) * 8

        # Tile sizing from an explicit VMEM budget (double-buffered inputs).
        per_row_bytes = 2 * num_head * 128 * itemsize
        budget_rows = max(8, vmem_input_budget_bytes // per_row_bytes)
        tile_rows = max(8, min(max_tile_rows,
                               (budget_rows // 8) * 8,
                               rows_per_split_target))

        tiles_per_split = -(-n_rows // (splits * tile_rows))
        n_total_blocks = -(-n_rows // tile_rows)
        needs_mask = (splits * tiles_per_split * tile_rows) != n_rows
        clamp_blocks = (splits * tiles_per_split) > n_total_blocks

        if clamp_blocks:
            # Steps that fall entirely past n_rows re-fetch the last real block;
            # the in-kernel mask zeroes their contribution.
            def in_index_map(s, r):
                return (jnp.minimum(s * tiles_per_split + r, n_total_blocks - 1), 0)
        else:
            def in_index_map(s, r):
                return (s * tiles_per_split + r, 0)

        kernel = functools.partial(
            _attention_loss_kernel,
            num_head=num_head,
            n_rows=n_rows,
            tile_rows=tile_rows,
            tiles_per_split=tiles_per_split,
            needs_mask=needs_mask,
        )

        # Explicit VMEM limit consistent with the Python-side tile budget
        # (v5e's 16 MiB scoped default would otherwise silently disagree).
        vmem_needed = (2 * num_head * tile_rows * 128 * itemsize   # dbl-buffered inputs
                       + 2 * 8 * 128 * 4                            # output block
                       + 8 * 128 * 4)                               # accumulator scratch
        vmem_limit = min(max(int(vmem_needed * 1.25) + (2 << 20), 16 << 20), 48 << 20)

        partials = pl.pallas_call(
            kernel,
            out_shape=jax.ShapeDtypeStruct((splits, 8, 128), jnp.float32),
            grid=(splits, tiles_per_split),
            in_specs=[pl.BlockSpec((tile_rows, 128), in_index_map)
                      for _ in range(num_head)],
            out_specs=pl.BlockSpec((1, 8, 128), lambda s, r: (s, 0, 0)),
            scratch_shapes=[pltpu.VMEM((8, 128), jnp.float32)],
            compiler_params=pltpu.CompilerParams(
                dimension_semantics=("parallel", "arbitrary"),
                vmem_limit_bytes=vmem_limit,
            ),
            cost_estimate=pl.CostEstimate(
                flops=3 * num_head * n_full,
                transcendentals=0,
                bytes_accessed=num_head * n_full * itemsize + splits * 8 * 128 * 4,
            ),
        )(*slabs)

        total_sq = jnp.sum(partials) + tail_sq

    mse_sum = total_sq * jnp.float32(1.0 / n_elem)
    return jnp.float32(cnt) / (mse_sum + jnp.float32(EPS))


def _attention_loss_ref(heads):
    """Pure-JAX reference mirroring the PyTorch module."""
    num_head = len(heads)
    if num_head <= 1:
        return jnp.float32(0.0)
    loss = jnp.float32(0.0)
    cnt = 0
    for i in range(num_head - 1):
        for j in range(i + 1, num_head):
            d = heads[i].astype(jnp.float32) - heads[j].astype(jnp.float32)
            loss = loss + jnp.mean(d * d)
            cnt += 1
    return jnp.float32(cnt) / (loss + jnp.float32(EPS))


if __name__ == "__main__":
    def run_case(num_head, shape, dtype, rtol):
        keys = jax.random.split(jax.random.PRNGKey(0), num_head)
        heads = [jax.random.normal(k, shape, dtype=jnp.float32).astype(dtype)
                 for k in keys]
        out = jax.block_until_ready(attention_loss(heads))
        ref = jax.block_until_ready(_attention_loss_ref(heads))
        assert jnp.allclose(out, ref, rtol=rtol, atol=1e-5), (num_head, shape, dtype, out, ref)

    # 3 heads, (2,4,16,16): 2048 elems -> 16 rows, clean 2-way split, pairwise path.
    run_case(3, (2, 4, 16, 16), jnp.float32, 2e-4)
    # 4 heads, (3,5,16,16): 3840 elems -> 30 rows, partial-tile mask + centered O(n) path.
    run_case(4, (3, 5, 16, 16), jnp.float32, 2e-4)
    # 4 heads, (2,5,13,16): 2080 elems -> 32-element tail handled in plain JAX.
    run_case(4, (2, 5, 13, 16), jnp.float32, 2e-4)
    # bf16 inputs kept in native dtype (half the HBM traffic), cast in-kernel.
    run_case(3, (2, 4, 16, 16), jnp.bfloat16, 1e-3)

    print("KERNEL_OK")
</pallas_src>

<mosaic_0001>
module attributes {stable_mosaic.version = 11 : i64} {
  func.func @_attention_loss_kernel(%arg0: i32, %arg1: i32, %arg2: memref<8x128xf32, #tpu.memory_space<vmem>>, %arg3: memref<8x128xf32, #tpu.memory_space<vmem>>, %arg4: memref<8x128xf32, #tpu.memory_space<vmem>>, %arg5: memref<1x8x128xf32, #tpu.memory_space<vmem>>, %arg6: memref<8x128xf32, #tpu.memory_space<vmem>>) attributes {dimension_semantics = [#tpu.dimension_semantics<parallel>, #tpu.dimension_semantics<arbitrary>], iteration_bounds = array<i64: 2, 1>, scalar_prefetch = 0 : i64, scratch_operands = 1 : i64, tpu.core_type = #tpu.core_type<tc>, window_params = [{transform_indices = @transform_0, window_bounds = array<i64: 8, 128>}, {transform_indices = @transform_1, window_bounds = array<i64: 8, 128>}, {transform_indices = @transform_2, window_bounds = array<i64: 8, 128>}, {transform_indices = @transform_3, window_bounds = array<i64: 1, 8, 128>}]} {
    %c0_i32 = arith.constant 0 : i32
    %0 = arith.cmpi eq, %arg1, %c0_i32 : i32
    %1 = arith.extui %0 : i1 to i32
    %c0_i32_0 = arith.constant 0 : i32
    %2 = arith.cmpi ne, %1, %c0_i32_0 : i32
    scf.if %2 {
      %cst_12 = arith.constant 0.000000e+00 : f32
      %22 = vector.broadcast %cst_12 : f32 to vector<8x128xf32>
      %c0_13 = arith.constant 0 : index
      %c0_14 = arith.constant 0 : index
      %23 = vector.load %arg6[%c0_13, %c0_14] : memref<8x128xf32, #tpu.memory_space<vmem>>, vector<8x128xf32>
      tpu.vector_store %arg6[%c0_13, %c0_14], %22 {strides = array<i32>} : memref<8x128xf32, #tpu.memory_space<vmem>>, vector<8x128xf32>,
    } else {
    }
    %c0 = arith.constant 0 : index
    %c0_1 = arith.constant 0 : index
    %3 = vector.load %arg2[%c0, %c0_1] : memref<8x128xf32, #tpu.memory_space<vmem>>, vector<8x128xf32>
    %c0_2 = arith.constant 0 : index
    %c0_3 = arith.constant 0 : index
    %4 = vector.load %arg3[%c0_2, %c0_3] : memref<8x128xf32, #tpu.memory_space<vmem>>, vector<8x128xf32>
    %c0_4 = arith.constant 0 : index
    %c0_5 = arith.constant 0 : index
    %5 = vector.load %arg4[%c0_4, %c0_5] : memref<8x128xf32, #tpu.memory_space<vmem>>, vector<8x128xf32>
    %6 = arith.subf %3, %4 : vector<8x128xf32>
    %7 = arith.mulf %6, %6 : vector<8x128xf32>
    %8 = arith.subf %3, %5 : vector<8x128xf32>
    %9 = arith.mulf %8, %8 : vector<8x128xf32>
    %10 = arith.addf %7, %9 : vector<8x128xf32>
    %11 = arith.subf %4, %5 : vector<8x128xf32>
    %12 = arith.mulf %11, %11 : vector<8x128xf32>
    %13 = arith.addf %10, %12 : vector<8x128xf32>
    %c0_6 = arith.constant 0 : index
    %c0_7 = arith.constant 0 : index
    %14 = vector.load %arg6[%c0_6, %c0_7] : memref<8x128xf32, #tpu.memory_space<vmem>>, vector<8x128xf32>
    %15 = vector.shape_cast %13 : vector<8x128xf32> to vector<1x8x128xf32>
    %cst = arith.constant dense<0.000000e+00> : vector<8x128xf32>
    %16 = vector.multi_reduction <add>, %15, %cst [0] : vector<1x8x128xf32> to vector<8x128xf32>
    %17 = arith.addf %14, %16 : vector<8x128xf32>
    %c0_8 = arith.constant 0 : index
    %c0_9 = arith.constant 0 : index
    %18 = vector.load %arg6[%c0_8, %c0_9] : memref<8x128xf32, #tpu.memory_space<vmem>>, vector<8x128xf32>
    tpu.vector_store %arg6[%c0_8, %c0_9], %17 {strides = array<i32>} : memref<8x128xf32, #tpu.memory_space<vmem>>, vector<8x128xf32>,
    %c0_i32_10 = arith.constant 0 : i32
    %19 = arith.cmpi eq, %arg1, %c0_i32_10 : i32
    %20 = arith.extui %19 : i1 to i32
    %c0_i32_11 = arith.constant 0 : i32
    %21 = arith.cmpi ne, %20, %c0_i32_11 : i32
    scf.if %21 {
      %c0_12 = arith.constant 0 : index
      %c0_13 = arith.constant 0 : index
      %22 = vector.load %arg6[%c0_12, %c0_13] : memref<8x128xf32, #tpu.memory_space<vmem>>, vector<8x128xf32>
      %c0_14 = arith.constant 0 : index
      %c0_15 = arith.constant 0 : index
      %c0_16 = arith.constant 0 : index
      %23 = vector.load %arg5[%c0_14, %c0_15, %c0_16] : memref<1x8x128xf32, #tpu.memory_space<vmem>>, vector<1x8x128xf32>
      %24 = vector.shape_cast %23 : vector<1x8x128xf32> to vector<8x128xf32>
      %25 = vector.shape_cast %22 : vector<8x128xf32> to vector<1x8x128xf32>
      tpu.vector_store %arg5[%c0_14, %c0_15, %c0_16], %25 {strides = array<i32>} : memref<1x8x128xf32, #tpu.memory_space<vmem>>, vector<1x8x128xf32>,
    } else {
    }
    return
  }
  func.func @transform_0(%arg0: i32, %arg1: i32) -> (i32, i32) {
    %c1_i32 = arith.constant 1 : i32
    %0 = arith.muli %arg0, %c1_i32 : i32
    %1 = arith.addi %0, %arg1 : i32
    %c0_i32 = arith.constant 0 : i32
    %c0_i32_0 = arith.constant 0 : i32
    return %1, %c0_i32 : i32, i32
  }
  func.func @transform_1(%arg0: i32, %arg1: i32) -> (i32, i32) {
    %c1_i32 = arith.constant 1 : i32
    %0 = arith.muli %arg0, %c1_i32 : i32
    %1 = arith.addi %0, %arg1 : i32
    %c0_i32 = arith.constant 0 : i32
    %c0_i32_0 = arith.constant 0 : i32
    return %1, %c0_i32 : i32, i32
  }
  func.func @transform_2(%arg0: i32, %arg1: i32) -> (i32, i32) {
    %c1_i32 = arith.constant 1 : i32
    %0 = arith.muli %arg0, %c1_i32 : i32
    %1 = arith.addi %0, %arg1 : i32
    %c0_i32 = arith.constant 0 : i32
    %c0_i32_0 = arith.constant 0 : i32
    return %1, %c0_i32 : i32, i32
  }
  func.func @transform_3(%arg0: i32, %arg1: i32) -> (i32, i32, i32) {
    %c0_i32 = arith.constant 0 : i32
    %c0_i32_0 = arith.constant 0 : i32
    %c0_i32_1 = arith.constant 0 : i32
    return %arg0, %c0_i32, %c0_i32_0 : i32, i32, i32
  }
}

</mosaic_0001>

<llo_original>
// kernel: tpu_custom_call.1
$region0: #{tpu_custom_call.1}
  #allocation0 [shape = 'u32[]', space=smem, size = 0x4, offset = 0x4, fixed_abs, tag = 'smem constant byte address 0x4 - core index']
  #allocation1 [shape = 'u32[144,128]{1,0:T(1,128)}', space=vmem, size = 0x12000, scoped, tag = 'internal scratch']
  #allocation2 [shape = 'f32[8,128]{1,0:T(8,128)}', space=vmem, size = 0x1000, scoped, tag = 'scratch operand']
  %s0 = inlined_call_operand.hbm [shape: f32[16,128], index: 0, kind: input, shape index: {}]
  %s1 = inlined_call_operand.hbm [shape: f32[16,128], index: 1, kind: input, shape index: {}]
  %s2 = inlined_call_operand.hbm [shape: f32[16,128], index: 2, kind: input, shape index: {}]
  %s3 = inlined_call_operand.hbm [shape: f32[2,8,128], index: 3, kind: output, shape index: {}]
  %s4 = sld [smem:[#allocation0]]
  $region65: #{tpu_custom_call.1} parent=0
    _
  %s6 = ssub.s32 1, %s4
  %s7 = scalar_select 0, %s6, %s4
  $region1: #{tpu_custom_call.1} parent=0
    #allocation3 [shape = 'u8[8192]{0}', space=vmem, size = 0x2000, scoped, tag = 'input window, operand 0']
    #allocation4 [shape = 's32[2]{0}', space=sflag, size = 0x8, scoped, tag = 'scoped memory for tpu_custom_call.1']
    #allocation5 [shape = 's32[2]{0}', space=sflag, size = 0x8, scoped, tag = 'scoped memory for tpu_custom_call.1']
    #allocation6 [shape = 'u8[8192]{0}', space=vmem, size = 0x2000, scoped, tag = 'input window, operand 1']
    #allocation7 [shape = 's32[2]{0}', space=sflag, size = 0x8, scoped, tag = 'scoped memory for tpu_custom_call.1']
    #allocation8 [shape = 'u8[8192]{0}', space=vmem, size = 0x2000, scoped, tag = 'input window, operand 2']
    #allocation9 [shape = 'u8[8192]{0}', space=vmem, size = 0x2000, scoped, tag = 'output window, operand 0']
    %8 = vsyncpa [#allocation4], 0
    %s9 = scalar_lea.sflag [#allocation4], 1
    %10 = vsyncpa %s9, 0
    %11 = vsyncpa [#allocation7], 0
    %s12 = scalar_lea.sflag [#allocation7], 1
    %13 = vsyncpa %s12, 0
    %14 = vsyncpa [#allocation5], 0
    %s15 = scalar_lea.sflag [#allocation5], 1
    %16 = vsyncpa %s15, 0
    loop: start=0, step=1, limit=4
    $region2: #{tpu_custom_call.1} parent=1 // loop_pre_header
      _
    $region3: #{tpu_custom_call.1} parent=1 // loop_header
      %s18 = sphi 0, %s22
      %p19 = scmp.ge.s32.totalorder %s18, 4
      %s25 = sphi 0, %s37
      %s26 = sphi 0, %s33
      %s27 = sphi 0, %s25
      %s28 = sphi 0, %s26
      %s29 = sphi 0, %s27
      %s30 = sphi 0, %s28
      %s42 = sphi 0, %s44
      %s45 = sphi 0, %s42
      %s46 = sphi 0, %s45
      %s62 = sphi 0, %s46
      %s70 = sphi 0, %s72
      %s73 = sphi 0, %s70
      %s74 = sphi 0, %s73
      %s90 = sphi 0, %s74
      %s98 = sphi 0, %s100
      %s101 = sphi 0, %s98
      %s102 = sphi 0, %s101
      %s118 = sphi 0, %s102
      %s124 = sphi 0, %s126
      %s127 = sphi 0, %s124
      %s128 = sphi 0, %s127
      %s144 = sphi 0, %s128
    $region4: #{tpu_custom_call.1} parent=1 // loop_header_branch
      %21 = sbr.rel (%p19) target = $region8
    $region5: #{tpu_custom_call.1} parent=1 // loop_body
      %s23 = ssub.s32 %s18, 1
      %s24 = ssub.s32 %s18, 2
      %s31 = sadd.s32 1, %s26
      %p32 = scmp.ge.s32.totalorder %s31, 1
      %s33 = scalar_select %p32, 0, %s31
      %s34 = sadd.s32 1, %s25
      %s35 = scalar_select %p32, %s34, %s25
      %p36 = scmp.ge.s32.totalorder %s35, 2
      %s37 = scalar_select %p36, 0, %s35
      %s38 = sadd.s32 %s25, %s26
      %s39 = sadd.s32 %s37, %s33
      %s40 = ssub.s32 %s38, %s39
      %p41 = scmp.eq.s32.totalorder %s40, 0
      %s43 = sadd.s32 %s42, 1
      %s44 = scalar_select %p41, %s42, %s43
      %p47 = pneg %p41
      %p48 = scmp.eq.s32.totalorder %s18, 1
      %p49 = por %p47, %p48
      %p50 = scmp.ne.s32.totalorder %s42, %s45
      %p51 = scmp.eq.s32.totalorder %s18, 0
      %p52 = por %p50, %p51
      %p53 = scmp.ne.s32.totalorder %s42, %s45
      %p54 = scmp.eq.s32.totalorder %s23, 1
      %p55 = por %p53, %p54
      %p56 = scmp.ne.s32.totalorder %s45, %s46
      %p57 = scmp.eq.s32.totalorder %s23, 0
      %p58 = por %p56, %p57
      %p59 = scmp.ne.s32.totalorder %s45, %s46
      %p60 = scmp.eq.s32.totalorder %s24, 1
      %p61 = por %p59, %p60
      %p63 = scmp.ne.s32.totalorder %s46, %s62
      %p64 = scmp.eq.s32.totalorder %s24, 0
      %p65 = por %p63, %p64
      %s66 = sadd.s32 %s25, %s26
      %s67 = sadd.s32 %s37, %s33
      %s68 = ssub.s32 %s66, %s67
      %p69 = scmp.eq.s32.totalorder %s68, 0
      %s71 = sadd.s32 %s70, 1
      %s72 = scalar_select %p69, %s70, %s71
      %p75 = pneg %p69
      %p76 = scmp.eq.s32.totalorder %s18, 1
      %p77 = por %p75, %p76
      %p78 = scmp.ne.s32.totalorder %s70, %s73
      %p79 = scmp.eq.s32.totalorder %s18, 0
      %p80 = por %p78, %p79
      %p81 = scmp.ne.s32.totalorder %s70, %s73
      %p82 = scmp.eq.s32.totalorder %s23, 1
      %p83 = por %p81, %p82
      %p84 = scmp.ne.s32.totalorder %s73, %s74
      %p85 = scmp.eq.s32.totalorder %s23, 0
      %p86 = por %p84, %p85
      %p87 = scmp.ne.s32.totalorder %s73, %s74
      %p88 = scmp.eq.s32.totalorder %s24, 1
      %p89 = por %p87, %p88
      %p91 = scmp.ne.s32.totalorder %s74, %s90
      %p92 = scmp.eq.s32.totalorder %s24, 0
      %p93 = por %p91, %p92
      %s94 = sadd.s32 %s25, %s26
      %s95 = sadd.s32 %s37, %s33
      %s96 = ssub.s32 %s94, %s95
      %p97 = scmp.eq.s32.totalorder %s96, 0
      %s99 = sadd.s32 %s98, 1
      %s100 = scalar_select %p97, %s98, %s99
      %p103 = pneg %p97
      %p104 = scmp.eq.s32.totalorder %s18, 1
      %p105 = por %p103, %p104
      %p106 = scmp.ne.s32.totalorder %s98, %s101
      %p107 = scmp.eq.s32.totalorder %s18, 0
      %p108 = por %p106, %p107
      %p109 = scmp.ne.s32.totalorder %s98, %s101
      %p110 = scmp.eq.s32.totalorder %s23, 1
      %p111 = por %p109, %p110
      %p112 = scmp.ne.s32.totalorder %s101, %s102
      %p113 = scmp.eq.s32.totalorder %s23, 0
      %p114 = por %p112, %p113
      %p115 = scmp.ne.s32.totalorder %s101, %s102
      %p116 = scmp.eq.s32.totalorder %s24, 1
      %p117 = por %p115, %p116
      %p119 = scmp.ne.s32.totalorder %s102, %s118
      %p120 = scmp.eq.s32.totalorder %s24, 0
      %p121 = por %p119, %p120
      %s122 = ssub.s32 %s25, %s37
      %p123 = scmp.eq.s32.totalorder %s122, 0
      %s125 = sadd.s32 %s124, 1
      %s126 = scalar_select %p123, %s124, %s125
      %p129 = pneg %p123
      %p130 = scmp.eq.s32.totalorder %s18, 1
      %p131 = por %p129, %p130
      %p132 = scmp.ne.s32.totalorder %s124, %s127
      %p133 = scmp.eq.s32.totalorder %s18, 0
      %p134 = por %p132, %p133
      %p135 = scmp.ne.s32.totalorder %s124, %s127
      %p136 = scmp.eq.s32.totalorder %s23, 1
      %p137 = por %p135, %p136
      %p138 = scmp.ne.s32.totalorder %s127, %s128
      %p139 = scmp.eq.s32.totalorder %s23, 0
      %p140 = por %p138, %p139
      %p141 = scmp.ne.s32.totalorder %s127, %s128
      %p142 = scmp.eq.s32.totalorder %s24, 1
      %p143 = por %p141, %p142
      %p145 = scmp.ne.s32.totalorder %s128, %s144
      %p146 = scmp.eq.s32.totalorder %s24, 0
      %p147 = por %p145, %p146
      %p148 = scmp.le.s32.totalorder 1, %s18
      %p149 = scmp.lt.s32.totalorder %s18, 3
      %p150 = pnand %p148, %p149
      %p151 = pneg %p150
      // Predicated region
      $region9: #{tpu_custom_call.1} parent=5 // pred_check
        _
      $region10: #{tpu_custom_call.1} parent=5 // pred_check_branch
        %153 = sbr.rel (%p150) target = $region12
      $region11: #{tpu_custom_call.1} parent=5 // pred_region
        %s154 = ssub.s32 %s18, 1
      $region12: #{tpu_custom_call.1} parent=5 // pred_fallthru
        _
      %p155 = scmp.lt.s32.totalorder %s18, 2
      // Predicated region
      $region13: #{tpu_custom_call.1} parent=5 // pred_check
        %p156 = pneg %p155
      $region14: #{tpu_custom_call.1} parent=5 // pred_check_branch
        %158 = sbr.rel (%p156) target = $region16
      $region15: #{tpu_custom_call.1} parent=5 // pred_region
        // Predicated region
        $region17: #{tpu_custom_call.1} parent=15 // pred_check
          %p159 = pneg %p52
        $region18: #{tpu_custom_call.1} parent=15 // pred_check_branch
          %161 = sbr.rel (%p159) target = $region20
        $region19: #{tpu_custom_call.1} parent=15 // pred_region
          %s162 = sand.u32 %s42, 1
          %s163 = scalar_lea.sflag [#allocation4], %s162
          %s164 = sand.u32 %s42, 1
          %s165 = smul.addr %s164, 8
          %s166 = scalar_lea.vmem [#allocation3], %s165
          %s167 = sadd.s32 %s25, %s26
          %s169 = ssub.s32 128, 128
          %170 = vsyncadd %s163, %s169
          %s171 = smul.addr %s167, 128
          %s172 = scalar_lea.hbm %s0, %s171
          %s174 = sshll.u32 %s166, 4
          %s175 = int_to_ptr.vmem [resolvable:$true] %s174
          %177 = dma.hbm_to_vmem [thread:$0]  %s172, 128, %s175, %s163
        $region20: #{tpu_custom_call.1} parent=15 // pred_fallthru
          _
        // Predicated region
        $region21: #{tpu_custom_call.1} parent=15 // pred_check
          %p178 = pneg %p80
        $region22: #{tpu_custom_call.1} parent=15 // pred_check_branch
          %180 = sbr.rel (%p178) target = $region24
        $region23: #{tpu_custom_call.1} parent=15 // pred_region
          %s181 = sand.u32 %s18, 1
          %s182 = scalar_lea.sflag [#allocation7], %s181
          %s183 = sand.u32 %s70, 1
          %s184 = smul.addr %s183, 8
          %s185 = scalar_lea.vmem [#allocation6], %s184
          %s186 = sadd.s32 %s25, %s26
          %s188 = ssub.s32 128, 128
          %189 = vsyncadd %s182, %s188
          %s190 = smul.addr %s186, 128
          %s191 = scalar_lea.hbm %s1, %s190
          %s193 = sshll.u32 %s185, 4
          %s194 = int_to_ptr.vmem [resolvable:$true] %s193
          %196 = dma.hbm_to_vmem [thread:$0]  %s191, 128, %s194, %s182
        $region24: #{tpu_custom_call.1} parent=15 // pred_fallthru
          _
        // Predicated region
        $region25: #{tpu_custom_call.1} parent=15 // pred_check
          %p197 = pneg %p108
        $region26: #{tpu_custom_call.1} parent=15 // pred_check_branch
          %199 = sbr.rel (%p197) target = $region28
        $region27: #{tpu_custom_call.1} parent=15 // pred_region
          %s200 = sand.u32 %s18, 1
          %s201 = scalar_lea.sflag [#allocation7], %s200
          %s202 = sand.u32 %s98, 1
          %s203 = smul.addr %s202, 8
          %s204 = scalar_lea.vmem [#allocation8], %s203
          %s205 = sadd.s32 %s25, %s26
          %s207 = ssub.s32 128, 128
          %208 = vsyncadd %s201, %s207
          %s209 = smul.addr %s205, 128
          %s210 = scalar_lea.hbm %s2, %s209
          %s212 = sshll.u32 %s204, 4
          %s213 = int_to_ptr.vmem [resolvable:$true] %s212
          %215 = dma.hbm_to_vmem [thread:$0]  %s210, 128, %s213, %s201
        $region28: #{tpu_custom_call.1} parent=15 // pred_fallthru
          _
      $region16: #{tpu_custom_call.1} parent=5 // pred_fallthru
        _
      %p216 = scmp.le.s32.totalorder 1, %s18
      %p217 = scmp.lt.s32.totalorder %s18, 3
      %p218 = pnand %p216, %p217
      %p219 = pneg %p218
      // Predicated region
      $region29: #{tpu_custom_call.1} parent=5 // pred_check
        _
      $region30: #{tpu_custom_call.1} parent=5 // pred_check_branch
        %221 = sbr.rel (%p218) target = $region32
      $region31: #{tpu_custom_call.1} parent=5 // pred_region
        %s222 = ssub.s32 %s18, 1
        %s223 = sand.u32 %s45, 1
        %s224 = scalar_lea.sflag [#allocation4], %s223
        %s225 = sand.u32 %s45, 1
        %s226 = smul.addr %s225, 8
        %s227 = scalar_lea.vmem [#allocation3], %s226
        // Predicated region
        $region33: #{tpu_custom_call.1} parent=31 // pred_check
          %p228 = pneg %p58
        $region34: #{tpu_custom_call.1} parent=31 // pred_check_branch
          %230 = sbr.rel (%p228) target = $region36
        $region35: #{tpu_custom_call.1} parent=31 // pred_region
          %231 = dma.done %s224, 128
        $region36: #{tpu_custom_call.1} parent=31 // pred_fallthru
          _
        %s232 = sand.u32 %s23, 1
        %s233 = scalar_lea.sflag [#allocation7], %s232
        %s234 = sand.u32 %s73, 1
        %s235 = smul.addr %s234, 8
        %s236 = scalar_lea.vmem [#allocation6], %s235
        // Predicated region
        $region37: #{tpu_custom_call.1} parent=31 // pred_check
          %p237 = pneg %p86
        $region38: #{tpu_custom_call.1} parent=31 // pred_check_branch
          %239 = sbr.rel (%p237) target = $region40
        $region39: #{tpu_custom_call.1} parent=31 // pred_region
          %240 = dma.done %s233, 128
        $region40: #{tpu_custom_call.1} parent=31 // pred_fallthru
          _
        %s241 = sand.u32 %s23, 1
        %s242 = scalar_lea.sflag [#allocation7], %s241
        %s243 = sand.u32 %s101, 1
        %s244 = smul.addr %s243, 8
        %s245 = scalar_lea.vmem [#allocation8], %s244
        // Predicated region
        $region41: #{tpu_custom_call.1} parent=31 // pred_check
          %p246 = pneg %p114
        $region42: #{tpu_custom_call.1} parent=31 // pred_check_branch
          %248 = sbr.rel (%p246) target = $region44
        $region43: #{tpu_custom_call.1} parent=31 // pred_region
          %249 = dma.done %s242, 128
        $region44: #{tpu_custom_call.1} parent=31 // pred_fallthru
          _
        %s250 = sand.u32 %s45, 1
        %s251 = scalar_lea.sflag [#allocation4], %s250
        %s252 = sand.u32 %s45, 1
        %s253 = smul.addr %s252, 8
        %s254 = scalar_lea.vmem [#allocation3], %s253
        %p255 = pneg %p58
        %p256 = pneg %p55
        %s257 = sand.u32 %s23, 1
        %s258 = scalar_lea.sflag [#allocation7], %s257
        %s259 = sand.u32 %s73, 1
        %s260 = smul.addr %s259, 8
        %s261 = scalar_lea.vmem [#allocation6], %s260
        %p262 = pneg %p86
        %p263 = pneg %p83
        %s264 = sand.u32 %s23, 1
        %s265 = scalar_lea.sflag [#allocation7], %s264
        %s266 = sand.u32 %s101, 1
        %s267 = smul.addr %s266, 8
        %s268 = scalar_lea.vmem [#allocation8], %s267
        %p269 = pneg %p114
        %p270 = pneg %p111
        %p271 = pneg %p140
        %p272 = pneg %p137
        %s273 = sand.u32 %s127, 1
        %s274 = scalar_lea.sflag [#allocation5], %s273
        %s275 = sand.u32 %s127, 1
        %s276 = smul.addr %s275, 8
        %s277 = scalar_lea.vmem [#allocation9], %s276
        %s278 = sadd.s32 %s27, %s28
        %s279 = sadd.s32 %s27, %s28
        %s280 = sadd.s32 %s27, %s28
        %p281 = scmp.eq.s32.totalorder %s28, 0
        // Predicated region
        $region45: #{tpu_custom_call.1} parent=31 // pred_check
          %p282 = pneg %p281
        $region46: #{tpu_custom_call.1} parent=31 // pred_check_branch
          %284 = sbr.rel (%p282) target = $region48
        $region47: #{tpu_custom_call.1} parent=31 // pred_region
          %285 = vst [vmem:[#allocation2] sm:$0xff] 0.0
        $region48: #{tpu_custom_call.1} parent=31 // pred_fallthru
          _
        %v286 = vld [vmem:[%s227] sm:$0xff]
        %v287 = vld [vmem:[%s236] sm:$0xff]
        %v288 = vld [vmem:[%s245] sm:$0xff]
        %v289 = vsub.f32 %v286, %v287
        %v290 = vmul.f32 %v289, %v289
        %v291 = vsub.f32 %v286, %v288
        %v292 = vmul.f32 %v291, %v291
        %v293 = vadd.f32 %v290, %v292
        %v294 = vsub.f32 %v287, %v288
        %v295 = vmul.f32 %v294, %v294
        %v296 = vadd.f32 %v293, %v295
        %v297 = vld [vmem:[#allocation2] sm:$0xff]
        %v298 = vadd.f32 %v296, 0.0
        %v299 = vadd.f32 %v297, %v298
        %300 = vst [vmem:[#allocation2] sm:$0xff] %v299
        // Predicated region
        $region49: #{tpu_custom_call.1} parent=31 // pred_check
          %p301 = pneg %p281
        $region50: #{tpu_custom_call.1} parent=31 // pred_check_branch
          %303 = sbr.rel (%p301) target = $region52
        $region51: #{tpu_custom_call.1} parent=31 // pred_region
          %v304 = vld [vmem:[#allocation2] sm:$0xff]
          %305 = vst [vmem:[%s277] sm:$0xff] %v304
        $region52: #{tpu_custom_call.1} parent=31 // pred_fallthru
          _
        %s306 = sand.u32 %s127, 1
        %s307 = scalar_lea.sflag [#allocation5], %s306
        %s308 = sand.u32 %s127, 1
        %s309 = smul.addr %s308, 8
        %s310 = scalar_lea.vmem [#allocation9], %s309
        // Predicated region
        $region53: #{tpu_custom_call.1} parent=31 // pred_check
          %p311 = pneg %p137
        $region54: #{tpu_custom_call.1} parent=31 // pred_check_branch
          %313 = sbr.rel (%p311) target = $region56
        $region55: #{tpu_custom_call.1} parent=31 // pred_region
          %s315 = ssub.s32 128, 128
          %316 = vsyncadd %s307, %s315
          %s317 = smul.addr %s27, 128
          %s318 = scalar_lea.hbm %s3, %s317
          %s320 = sshll.u32 %s310, 4
          %s321 = int_to_ptr.vmem [resolvable:$true] %s320
          %323 = dma.vmem_to_hbm [thread:$0]  %s321, 128, %s318, %s307
        $region56: #{tpu_custom_call.1} parent=31 // pred_fallthru
          _
      $region32: #{tpu_custom_call.1} parent=5 // pred_fallthru
        _
      %p324 = scmp.le.s32.totalorder 2, %s18
      // Predicated region
      $region57: #{tpu_custom_call.1} parent=5 // pred_check
        %p325 = pneg %p324
      $region58: #{tpu_custom_call.1} parent=5 // pred_check_branch
        %327 = sbr.rel (%p325) target = $region60
      $region59: #{tpu_custom_call.1} parent=5 // pred_region
        %s328 = ssub.s32 %s18, 2
        // Predicated region
        $region61: #{tpu_custom_call.1} parent=59 // pred_check
          %p329 = pneg %p143
        $region62: #{tpu_custom_call.1} parent=59 // pred_check_branch
          %331 = sbr.rel (%p329) target = $region64
        $region63: #{tpu_custom_call.1} parent=59 // pred_region
          %s332 = sand.u32 %s128, 1
          %s333 = scalar_lea.sflag [#allocation5], %s332
          %s334 = sand.u32 %s128, 1
          %s335 = smul.addr %s334, 8
          %s336 = scalar_lea.vmem [#allocation9], %s335
          %337 = dma.done %s333, 128
        $region64: #{tpu_custom_call.1} parent=59 // pred_fallthru
          _
      $region60: #{tpu_custom_call.1} parent=5 // pred_fallthru
        _
    $region6: #{tpu_custom_call.1} parent=1 // loop_footer
      %s22 = sadd.s32 1, %s18
    $region7: #{tpu_custom_call.1} parent=1 // loop_footer_branch
      %17 = sbr.rel target = $region3
    $region8: #{tpu_custom_call.1} parent=1 // loop_exit
      _
    %338 = vsyncpa [#allocation4], 1
    %s339 = scalar_lea.sflag [#allocation4], 1
    %340 = vsyncpa %s339, 1
    %341 = vsyncpa [#allocation7], 1
    %s342 = scalar_lea.sflag [#allocation7], 1
    %343 = vsyncpa %s342, 1
    %344 = vsyncpa [#allocation5], 1
    %s345 = scalar_lea.sflag [#allocation5], 1
    %346 = vsyncpa %s345, 1

</llo_original>
